<compile_context>
chip_gen: v7x
topology: tpu7x:2x2x1
jax: 0.10.0
libtpu: 0.0.40
codegen_flags: <defaults>
</compile_context>

<pallas_src>
import functools
import math

import jax
import jax.numpy as jnp
from jax.experimental import pallas as pl
from jax.experimental.pallas import tpu as pltpu


def _time2vec_kernel(tau_ref, w_ref, b_ref, out_ref, *, sub_width):
    # tau_ref: (TB, R*in)   w_ref: (R*in, R*F)   b_ref: (1, R*F)
    # out_ref: (TB, R*F)    sub_width = F (out_features)
    z = jnp.dot(
        tau_ref[...], w_ref[...], preferred_element_type=jnp.float32
    ) + b_ref[...]
    col = jax.lax.broadcasted_iota(jnp.int32, z.shape, dimension=1)
    # Within each packed F-wide sub-block, the last column is the linear
    # ("v2") feature; all other columns get sin() ("v1").
    is_linear = (col % sub_width) == (sub_width - 1)
    out_ref[...] = jnp.where(is_linear, z, jnp.sin(z)).astype(out_ref.dtype)


def _rows_per_slab(out_features, lane=128, max_pack=32):
    # Smallest R such that R * out_features is a multiple of the 128-lane
    # width; fall back to the simple layout for awkward widths.
    r = lane // math.gcd(out_features, lane)
    return r if r <= max_pack else 1


def pack_time2vec_params(w, b, w0, b0):
    """Pack parameters once at init time (keeps concat/kron off the hot path).

    Returns (w_packed, b_packed, out_features, rows_per_slab).
    """
    out_features = w.shape[1] + 1
    r = _rows_per_slab(out_features)
    w_cat = jnp.concatenate([w, w0], axis=-1)          # (in, F)
    b_cat = jnp.concatenate([b, b0], axis=-1)          # (F,)
    if r > 1:
        w_cat = jnp.kron(jnp.eye(r, dtype=w_cat.dtype), w_cat)  # (R*in, R*F)
        b_cat = jnp.tile(b_cat, r)                               # (R*F,)
    return w_cat, b_cat[None, :], out_features, r


def time2vec_packed(tau, w_packed, b_packed, out_features, rows_per_slab,
                    *, block_batch_rows=16384):
    """Hot path: tau (B, in_features) -> (B, out_features)."""
    B, in_features = tau.shape
    R = rows_per_slab
    F = out_features

    # Pad the batch so it reshapes cleanly into slab rows of R packed rows.
    B_pad = ((B + R - 1) // R) * R
    if B_pad != B:
        tau = jnp.pad(tau, ((0, B_pad - B), (0, 0)))
    slab_rows = B_pad // R
    tau_slab = tau.reshape(slab_rows, R * in_features)

    # Batch tile: ~block_batch_rows original rows per grid step (multiple of 8
    # slab rows).  ~1 MiB output tiles amortize the per-step pipeline overhead
    # while staying far below the VMEM limit on all generations (incl. v7x).
    tb_target = max(8, (block_batch_rows // R // 8) * 8)
    if slab_rows <= tb_target:
        tb = slab_rows          # single block == full dim, always legal
    else:
        tb = tb_target          # multiple of 8; tail block is masked by Pallas
    grid = (pl.cdiv(slab_rows, tb),)

    out_slab = pl.pallas_call(
        functools.partial(_time2vec_kernel, sub_width=F),
        out_shape=jax.ShapeDtypeStruct((slab_rows, R * F), tau.dtype),
        grid=grid,
        in_specs=[
            pl.BlockSpec((tb, R * in_features), lambda i: (i, 0)),
            pl.BlockSpec(w_packed.shape, lambda i: (0, 0)),
            pl.BlockSpec(b_packed.shape, lambda i: (0, 0)),
        ],
        out_specs=pl.BlockSpec((tb, R * F), lambda i: (i, 0)),
        compiler_params=pltpu.CompilerParams(
            dimension_semantics=("parallel",)),
    )(tau_slab, w_packed, b_packed)

    out = out_slab.reshape(B_pad, F)
    if B_pad != B:
        out = out[:B]
    return out


def time2vec(tau, w, b, w0, b0, **kwargs):
    """Convenience wrapper matching Time2Vec.forward (packs per call)."""
    w_p, b_p, F, R = pack_time2vec_params(w, b, w0, b0)
    return time2vec_packed(tau, w_p, b_p, F, R, **kwargs)


if __name__ == "__main__":
    # Small shapes consistent with forward(tau: (batch, in_features)).
    batch = 8
    in_features = 4
    out_features = 16

    key = jax.random.PRNGKey(0)
    k_tau, k_w0, k_b0, k_w, k_b = jax.random.split(key, 5)

    tau = jax.random.normal(k_tau, (batch, in_features), dtype=jnp.float32)
    w0 = jax.random.normal(k_w0, (in_features, 1), dtype=jnp.float32)
    b0 = jax.random.normal(k_b0, (1,), dtype=jnp.float32)
    w = jax.random.normal(k_w, (in_features, out_features - 1), dtype=jnp.float32)
    b = jax.random.normal(k_b, (out_features - 1,), dtype=jnp.float32)

    # Pack parameters once (init-time), reuse across forward calls.
    w_p, b_p, F, R = pack_time2vec_params(w, b, w0, b0)

    def ref_fn(t):
        return jnp.concatenate([jnp.sin(t @ w + b), t @ w0 + b0], axis=-1)

    out = jax.block_until_ready(time2vec_packed(tau, w_p, b_p, F, R))
    assert out.shape == (batch, out_features)
    assert jnp.allclose(out, ref_fn(tau), atol=1e-5, rtol=1e-5)

    # Also exercise the batch-tiled grid path: batch not a multiple of the
    # slab packing and more than one grid step (partial tail tile).
    tau2 = jax.random.normal(jax.random.PRNGKey(1), (77, in_features),
                             dtype=jnp.float32)
    out2 = jax.block_until_ready(
        time2vec_packed(tau2, w_p, b_p, F, R, block_batch_rows=32))
    assert out2.shape == (77, out_features)
    assert jnp.allclose(out2, ref_fn(tau2), atol=1e-5, rtol=1e-5)

    print("KERNEL_OK")
</pallas_src>

<mosaic_0001>
module attributes {stable_mosaic.version = 11 : i64} {
  func.func @_time2vec_kernel(%arg0: i32, %arg1: memref<1x32xf32, #tpu.memory_space<vmem>>, %arg2: memref<32x128xf32, #tpu.memory_space<vmem>>, %arg3: memref<1x128xf32, #tpu.memory_space<vmem>>, %arg4: memref<1x128xf32, #tpu.memory_space<vmem>>) attributes {dimension_semantics = [#tpu.dimension_semantics<parallel>], iteration_bounds = array<i64: 1>, scalar_prefetch = 0 : i64, scratch_operands = 0 : i64, tpu.core_type = #tpu.core_type<tc>, window_params = [{transform_indices = @transform_0, window_bounds = array<i64: 1, 32>}, {pipeline_mode = #tpu.pipeline_mode<synchronous>, transform_indices = @transform_1, window_bounds = array<i64: 32, 128>}, {pipeline_mode = #tpu.pipeline_mode<synchronous>, transform_indices = @transform_2, window_bounds = array<i64: 1, 128>}, {transform_indices = @transform_3, window_bounds = array<i64: 1, 128>}]} {
    %c0 = arith.constant 0 : index
    %c0_0 = arith.constant 0 : index
    %0 = vector.load %arg1[%c0, %c0_0] : memref<1x32xf32, #tpu.memory_space<vmem>>, vector<1x32xf32>
    %c0_1 = arith.constant 0 : index
    %c0_2 = arith.constant 0 : index
    %1 = vector.load %arg2[%c0_1, %c0_2] : memref<32x128xf32, #tpu.memory_space<vmem>>, vector<32x128xf32>
    %cst = arith.constant dense<0.000000e+00> : vector<1x128xf32>
    %2 = tpu.matmul %0, %1, %cst {dimension_numbers = #tpu.dot_dimension_numbers<[1], [0], [0], [1], [0, 0, 1, 1], [], []>} : vector<1x32xf32>, vector<32x128xf32>, vector<1x128xf32> -> vector<1x128xf32>
    %c0_3 = arith.constant 0 : index
    %c0_4 = arith.constant 0 : index
    %3 = vector.load %arg3[%c0_3, %c0_4] : memref<1x128xf32, #tpu.memory_space<vmem>>, vector<1x128xf32>
    %4 = arith.addf %2, %3 : vector<1x128xf32>
    %5 = tpu.iota {dimensions = array<i32: 1>} : vector<1x128xi32>
    %c16_i32 = arith.constant 16 : i32
    %c0_i32 = arith.constant 0 : i32
    %6 = arith.cmpi eq, %c16_i32, %c0_i32 : i32
    %c1_i32 = arith.constant 1 : i32
    %7 = arith.select %6, %c1_i32, %c16_i32 : i32
    %8 = vector.broadcast %7 : i32 to vector<1x128xi32>
    %9 = arith.remsi %5, %8 : vector<1x128xi32>
    %c0_i32_5 = arith.constant 0 : i32
    %10 = vector.broadcast %c0_i32_5 : i32 to vector<1x128xi32>
    %11 = arith.cmpi ne, %9, %10 : vector<1x128xi32>
    %c0_i32_6 = arith.constant 0 : i32
    %12 = vector.broadcast %c0_i32_6 : i32 to vector<1x128xi32>
    %13 = arith.cmpi slt, %9, %12 : vector<1x128xi32>
    %c0_i32_7 = arith.constant 0 : i32
    %14 = arith.cmpi slt, %7, %c0_i32_7 : i32
    %15 = vector.broadcast %14 : i1 to vector<1x128xi1>
    %16 = vector.broadcast %15 : vector<1x128xi1> to vector<1x128xi1>
    %17 = arith.xori %13, %16 : vector<1x128xi1>
    %18 = arith.andi %17, %11 : vector<1x128xi1>
    %19 = vector.broadcast %7 : i32 to vector<1x128xi32>
    %20 = arith.addi %9, %19 : vector<1x128xi32>
    %21 = arith.select %18, %20, %9 : vector<1x128xi1>, vector<1x128xi32>
    %c15_i32 = arith.constant 15 : i32
    %22 = vector.broadcast %c15_i32 : i32 to vector<1x128xi32>
    %23 = arith.cmpi eq, %21, %22 : vector<1x128xi32>
    %24 = math.sin %4 : vector<1x128xf32>
    %25 = arith.select %23, %4, %24 : vector<1x128xi1>, vector<1x128xf32>
    %c0_8 = arith.constant 0 : index
    %c0_9 = arith.constant 0 : index
    %26 = vector.load %arg4[%c0_8, %c0_9] : memref<1x128xf32, #tpu.memory_space<vmem>>, vector<1x128xf32>
    tpu.vector_store %arg4[%c0_8, %c0_9], %25 {strides = array<i32>} : memref<1x128xf32, #tpu.memory_space<vmem>>, vector<1x128xf32>,
    return
  }
  func.func @transform_0(%arg0: i32) -> (i32, i32) {
    %c0_i32 = arith.constant 0 : i32
    %c0_i32_0 = arith.constant 0 : i32
    return %arg0, %c0_i32 : i32, i32
  }
  func.func @transform_1(%arg0: i32) -> (i32, i32) {
    %c0_i32 = arith.constant 0 : i32
    %c0_i32_0 = arith.constant 0 : i32
    %c0_i32_1 = arith.constant 0 : i32
    return %c0_i32, %c0_i32_0 : i32, i32
  }
  func.func @transform_2(%arg0: i32) -> (i32, i32) {
    %c0_i32 = arith.constant 0 : i32
    %c0_i32_0 = arith.constant 0 : i32
    %c0_i32_1 = arith.constant 0 : i32
    return %c0_i32, %c0_i32_0 : i32, i32
  }
  func.func @transform_3(%arg0: i32) -> (i32, i32) {
    %c0_i32 = arith.constant 0 : i32
    %c0_i32_0 = arith.constant 0 : i32
    return %arg0, %c0_i32 : i32, i32
  }
}

</mosaic_0001>

<llo_original>
// kernel: tpu_custom_call.1
$region0: #{tpu_custom_call.1}
  #allocation0 [shape = 'u32[]', space=smem, size = 0x4, offset = 0x4, fixed_abs, tag = 'smem constant byte address 0x4 - core index']
  #allocation1 [shape = 'u32[144,128]{1,0:T(1,128)}', space=vmem, size = 0x12000, scoped, tag = 'internal scratch']
  %s0 = inlined_call_operand.hbm [shape: f32[1,32], index: 0, kind: input, shape index: {}]
  %s1 = inlined_call_operand.hbm [shape: f32[32,128], index: 1, kind: input, shape index: {}]
  %s2 = inlined_call_operand.vmem [shape: f32[1,128], index: 2, kind: input, shape index: {}]
  %s3 = inlined_call_operand.hbm [shape: f32[1,128], index: 3, kind: output, shape index: {}]
  %s4 = sld [smem:[#allocation0]]
  $region30: #{tpu_custom_call.1} parent=0
    _
  %s6 = ssub.s32 1, %s4
  %s7 = scalar_select 0, %s6, %s4
  $region1: #{tpu_custom_call.1} parent=0
    #allocation2 [shape = 'u8[512]{0}', space=vmem, size = 0x400, scoped, tag = 'input window, operand 0, single buffered']
    #allocation3 [shape = 's32[1]{0}', space=sflag, size = 0x4, scoped, tag = 'scoped memory for tpu_custom_call.1']
    #allocation4 [shape = 's32[1]{0}', space=sflag, size = 0x4, scoped, tag = 'scoped memory for tpu_custom_call.1']
    #allocation5 [shape = 'u8[16384]{0}', space=vmem, size = 0x4000, scoped, tag = 'input window, operand 1, single buffered']
    #allocation6 [shape = 's32[1]{0}', space=sflag, size = 0x4, scoped, tag = 'scoped memory for tpu_custom_call.1']
    #allocation7 [shape = 'u8[512]{0}', space=vmem, size = 0x400, scoped, tag = 'output window, operand 0, single buffered']
    %8 = vsyncpa [#allocation3], 0
    %9 = vsyncpa [#allocation6], 0
    %10 = vsyncpa [#allocation4], 0
    // Predicated region
    $region2: #{tpu_custom_call.1} parent=1 // pred_check
      _
    $region3: #{tpu_custom_call.1} parent=1 // pred_check_branch
      %12 = sbr.rel (0) target = $region5
    $region4: #{tpu_custom_call.1} parent=1 // pred_region
      %s14 = ssub.s32 16, 16
      %15 = vsyncadd [#allocation3], %s14
      %s17 = sshll.u32 [#allocation2], 4
      %s18 = int_to_ptr.vmem [resolvable:$true] %s17
      %20 = dma.hbm_to_vmem [thread:$0]  %s0, 16, %s18, [#allocation3]
    $region5: #{tpu_custom_call.1} parent=1 // pred_fallthru
      _
    // Predicated region
    $region6: #{tpu_custom_call.1} parent=1 // pred_check
      _
    $region7: #{tpu_custom_call.1} parent=1 // pred_check_branch
      %22 = sbr.rel (0) target = $region9
    $region8: #{tpu_custom_call.1} parent=1 // pred_region
      %s24 = ssub.s32 512, 512
      %25 = vsyncadd [#allocation6], %s24
      %s26 = sshll.u32 [#allocation5], 4
      %s27 = int_to_ptr.vmem [resolvable:$true] %s26
      %32 = dma.hbm_to_vmem [thread:$0]  %s1, 512, %s27, [#allocation6], 128, 128, 8
    $region9: #{tpu_custom_call.1} parent=1 // pred_fallthru
      _
    // Predicated region
    $region10: #{tpu_custom_call.1} parent=1 // pred_check
      _
    $region11: #{tpu_custom_call.1} parent=1 // pred_check_branch
      %34 = sbr.rel (0) target = $region13
    $region12: #{tpu_custom_call.1} parent=1 // pred_region
      _
    $region13: #{tpu_custom_call.1} parent=1 // pred_fallthru
      _
    // Predicated region
    $region14: #{tpu_custom_call.1} parent=1 // pred_check
      _
    $region15: #{tpu_custom_call.1} parent=1 // pred_check_branch
      %36 = sbr.rel (0) target = $region17
    $region16: #{tpu_custom_call.1} parent=1 // pred_region
      %37 = dma.done [#allocation3], 16
    $region17: #{tpu_custom_call.1} parent=1 // pred_fallthru
      _
    // Predicated region
    $region18: #{tpu_custom_call.1} parent=1 // pred_check
      _
    $region19: #{tpu_custom_call.1} parent=1 // pred_check_branch
      %39 = sbr.rel (0) target = $region21
    $region20: #{tpu_custom_call.1} parent=1 // pred_region
      %40 = dma.done [#allocation6], 512
    $region21: #{tpu_custom_call.1} parent=1 // pred_fallthru
      _
    %v41 = vld [vmem:[#allocation2] sm:$0x1]
    %v42 = vld [vmem:[#allocation5] sm:$0xff]
    %v43 = vld [vmem:[#allocation5 + $0x8] sm:$0xff]
    %v44 = vld [vmem:[#allocation5 + $0x10] sm:$0xff]
    %v45 = vld [vmem:[#allocation5 + $0x18] sm:$0xff]
    %v46 = vld [vmem:[%s2] sm:$0x1]
    %vm47 = vcmask 261120
    %v49 = vsel %vm47, %v41, 0
    %51 = vmatprep.subr.mxu0 0.0
    %52 = vmatpush1.msra.mxu0 %v42
    %53 = vmatprep.subr.mxu0 0.0
    %54 = vmatpush1.msra.mxu0 %v43
    %55 = vmatprep.subr.mxu0 0.0
    %56 = vmatpush1.msra.mxu0 %v44
    %57 = vmatprep.subr.mxu0 0.0
    %58 = vmatpush1.msra.mxu0 %v45
    %59 = vmatprep.subr.mxu0 0.0
    %60 = vmatpush1.msra.mxu0 0.0
    %61 = vmatprep.subr.mxu0 0.0
    %62 = vmatpush1.msra.mxu0 0.0
    %63 = vmatprep.subr.mxu0 0.0
    %64 = vmatpush1.msra.mxu0 0.0
    %65 = vmatprep.subr.mxu0 0.0
    %66 = vmatpush1.msra.mxu0 0.0
    %67 = vmatprep.subr.mxu0 0.0
    %68 = vmatpush1.msra.mxu0 0.0
    %69 = vmatprep.subr.mxu0 0.0
    %70 = vmatpush1.msra.mxu0 0.0
    %71 = vmatprep.subr.mxu0 0.0
    %72 = vmatpush1.msra.mxu0 0.0
    %73 = vmatprep.subr.mxu0 0.0
    %74 = vmatpush1.msra.mxu0 0.0
    %75 = vmatprep.subr.mxu0 0.0
    %76 = vmatpush1.msra.mxu0 0.0
    %77 = vmatprep.subr.mxu0 0.0
    %78 = vmatpush1.msra.mxu0 0.0
    %79 = vmatprep.subr.mxu0 0.0
    %80 = vmatpush1.msra.mxu0 0.0
    %81 = vmatprep.subr.mxu0 0.0
    %82 = vmatpush1.msra.mxu0 0.0
    %83 = vmatprep.subr.mxu0 0.0
    %84 = vmatpush1.msra.mxu0 0.0
    %85 = vmatprep.subr.mxu0 0.0
    %86 = vmatpush1.msra.mxu0 0.0
    %87 = vmatprep.subr.mxu0 0.0
    %88 = vmatpush1.msra.mxu0 0.0
    %89 = vmatprep.subr.mxu0 0.0
    %90 = vmatpush1.msra.mxu0 0.0
    %91 = vmatprep.subr.mxu0 0.0
    %92 = vmatpush1.msra.mxu0 0.0
    %93 = vmatprep.subr.mxu0 0.0
    %94 = vmatpush1.msra.mxu0 0.0
    %95 = vmatprep.subr.mxu0 0.0
    %96 = vmatpush1.msra.mxu0 0.0
    %97 = vmatprep.subr.mxu0 0.0
    %98 = vmatpush1.msra.mxu0 0.0
    %99 = vmatprep.subr.mxu0 0.0
    %100 = vmatpush1.msra.mxu0 0.0
    %101 = vmatprep.subr.mxu0 0.0
    %102 = vmatpush1.msra.mxu0 0.0
    %103 = vmatprep.subr.mxu0 0.0
    %104 = vmatpush1.msra.mxu0 0.0
    %105 = vmatprep.subr.mxu0 0.0
    %106 = vmatpush1.msra.mxu0 0.0
    %107 = vmatprep.subr.mxu0 0.0
    %108 = vmatpush1.msra.mxu0 0.0
    %109 = vmatprep.subr.mxu0 0.0
    %110 = vmatpush1.msra.mxu0 0.0
    %111 = vmatprep.subr.mxu0 0.0
    %112 = vmatpush1.msra.mxu0 0.0
    %113 = vmatprep.subr.mxu0 0.0
    %114 = vmatpush1.msra.mxu0 0.0
    %115 = vmatprep.mubr.f32.mxu0 0.0
    %116 = vmatmul.mubr.f32.gmra.mrb[0].mxu0 %v49
    %v117 = vpop.f32.mrb[0].mxu0
    %v118 = vadd.f32 %v46, %v117
    %v119 = vpop.f32.mrb[0].mxu0
    %120 = vdwg.mxu0
    %v121 = vlaneseq
    %v122 = vand.u32 %v121, 127
    %vm123 = vcmp.lt.s32.totalorder %v122, 0
    %v124 = vsub.s32 0, %v122
    %v125 = vsel %vm123, %v124, %v122
    %v126 = vshrl.u32 %v125, 4
    %v127 = vand.u32 %v125, 15
    %v128 = vsub.s32 0, %v127
    %v129 = vsel %vm123, %v128, %v127
    %vm130 = vcmp.ne.s32.totalorder %v129, 0
    %vm131 = vcmp.lt.s32.totalorder %v129, 0
    %vm132 = vmand %vm131, %vm130
    %v133 = vadd.s32 %v129, 16
    %v134 = vsel %vm132, %v133, %v129
    %vm135 = vcmp.eq.s32.totalorder %v134, 15
    %v136 = vand.u32 2147483647, %v118
    %vm137 = vcmp.le.f32.partialorder %v136, 0.7853982
    %vm138 = vcmp.lt.s32.totalorder %v118, 0
    %v139 = vand.u32 %v118, 2139095040
    %v140 = vshrl.u32 %v139, 23
    %v141 = vsub.s32 %v140, 127
    %v142 = vand.u32 2147483647, %v118
    %v143 = vand.u32 %v142, 8388607
    %v144 = vor.u32 %v143, 8388608
    %v145 = vsub.s32 0, %v144
    %v146 = vadd.s32 %v141, 1
    %vm147 = vcmp.gt.s32.totalorder %v146, 0
    %v148 = vsel %vm147, %v146, 0
    %v149 = vshrl.u32 %v148, 5
    %v150 = vand.u32 %v148, 31
    %v151 = vsub.s32 32, %v150
    %v152 = vshrl.u32 683565275, %v151
    %v153 = vshll.u32 683565275, %v150
    %v154 = vshrl.u32 2475754826, %v151
    %v155 = vor.u32 %v153, %v154
    %v156 = vshll.u32 2475754826, %v150
    %v157 = vshrl.u32 2131351028, %v151
    %v158 = vor.u32 %v156, %v157
    %v159 = vshll.u32 2131351028, %v150
    %v160 = vshrl.u32 2102212464, %v151
    %v161 = vor.u32 %v159, %v160
    %v162 = vshll.u32 2102212464, %v150
    %v163 = vshrl.u32 920167782, %v151
    %v164 = vor.u32 %v162, %v163
    %v165 = vshll.u32 920167782, %v150
    %v166 = vshrl.u32 1326507024, %v151
    %v167 = vor.u32 %v165, %v166
    %vm168 = vcmp.lt.s32.totalorder %v149, 1
    %vm169 = vcmp.lt.s32.totalorder %v149, 2
    %vm170 = vcmp.lt.s32.totalorder %v149, 3
    %vm171 = vcmp.lt.s32.totalorder %v149, 4
    %v172 = vsel %vm168, %v152, %v155
    %v173 = vsel %vm171, %v161, 2102212464
    %v174 = vsel %vm170, %v158, %v173
    %v175 = vsel %vm169, %v172, %v174
    %v176 = vsel %vm168, %v155, %v158
    %v177 = vsel %vm171, %v164, 920167782
    %v178 = vsel %vm170, %v161, %v177
    %v179 = vsel %vm169, %v176, %v178
    %v180 = vsel %vm168, %v158, %v161
    %v181 = vsel %vm171, %v167, 1326507024
    %v182 = vsel %vm170, %v164, %v181
    %v183 = vsel %vm169, %v180, %v182
    %v184 = vshll.u32 %v144, 8
    %v185 = vmul.u32.u64.compose %v184, %v183
    %v186 = vextract.low.u32 %v185
    %v187 = vextract.high.u32 %v185
    %v188 = vmul.u32.u64.compose %v184, %v179
    %v189 = vextract.low.u32 %v188
    %v190 = vextract.high.u32 %v188
    %v191 = vmul.u32 %v184, %v175
    %v192 = vadd.s32 %v187, %v189
    %vm193 = vc.u32 %v187, %v189
    %v194 = vadd.s32 %v190, 1
    %v195 = vsel %vm193, %v194, %v190
    %v196 = vadd.s32 %v191, %v195
    %v197 = vadd.s32 %v196, 536870912
    %v198 = vshrl.u32 %v197, 30
    %v199 = vshll.u32 %v198, 30
    %v200 = vsub.s32 %v196, %v199
    %vm201 = vcmp.lt.s32.totalorder %v200, 0
    %v202 = vsub.s32 0, %v200
    %v203 = vsel %vm201, %v202, %v200
    %v204 = vclz %v203
    %v205 = vsub.s32 %v204, 2
    %vm206 = vcmp.gt.s32.totalorder 0, %v205
    %v207 = vsel %vm206, 0, %v205
    %v208 = vsub.s32 32, %v207
    %v209 = vshll.u32 %v200, %v207
    %v210 = vshrl.u32 %v192, %v208
    %v211 = vor.u32 %v209, %v210
    %v212 = vsub.s32 4294967266, %v207
    %v213 = vadd.s32 %v212, 127
    %v214 = vshll.u32 %v213, 23
    %v215 = vor.u32 4788187, %v214
    %v216 = vand.u32 2147483647, %v215
    %v218 = vcvt.s32.f32 %v211
    %v219 = vmul.f32 %v218, %v216
    %v220 = vxor.u32 %v219, 2147483648
    %v221 = vsel %vm138, %v220, %v219
    %v222 = vsub.s32 4, %v198
    %v223 = vsel %vm138, %v222, %v198
    %v224 = vsel %vm137, %v118, %v221
    %v225 = vsel %vm137, 0, %v223
    %v226 = vcosq.f32.pop %v224
    %v227 = vsinq.f32.pop %v224
    %vm228 = vweird.f32 %v118
    %v229 = vadd.s32 %v225, 3
    %v230 = vand.u32 %v229, 3
    %vm231 = vcmp.lt.s32.totalorder %v230, 2
    %vm232 = vcmp.eq.s32.totalorder %v230, 0
    %v233 = vxor.u32 %v227, 2147483648
    %v234 = vsel %vm232, %v226, %v233
    %vm235 = vcmp.eq.s32.totalorder %v230, 2
    %v236 = vxor.u32 %v226, 2147483648
    %v237 = vsel %vm235, %v236, %v227
    %v238 = vsel %vm231, %v234, %v237
    %v239 = vsel %vm228, nan, %v238
    %v240 = vsel %vm135, %v118, %v239
    %241 = vst [vmem:[#allocation7] sm:$0x1] %v240
    // Predicated region
    $region22: #{tpu_custom_call.1} parent=1 // pred_check
      _
    $region23: #{tpu_custom_call.1} parent=1 // pred_check_branch
      %243 = sbr.rel (0) target = $region25
    $region24: #{tpu_custom_call.1} parent=1 // pred_region
      %s245 = ssub.s32 16, 16
      %246 = vsyncadd [#allocation4], %s245
      %s248 = sshll.u32 [#allocation7], 4
      %s249 = int_to_ptr.vmem [resolvable:$true] %s248
      %251 = dma.vmem_to_hbm [thread:$0]  %s249, 16, %s3, [#allocation4]
    $region25: #{tpu_custom_call.1} parent=1 // pred_fallthru
      _
    // Predicated region
    $region26: #{tpu_custom_call.1} parent=1 // pred_check
      _
    $region27: #{tpu_custom_call.1} parent=1 // pred_check_branch
      %253 = sbr.rel (0) target = $region29
    $region28: #{tpu_custom_call.1} parent=1 // pred_region
      %254 = dma.done [#allocation4], 16
    $region29: #{tpu_custom_call.1} parent=1 // pred_fallthru
      _
    %255 = vsyncpa [#allocation3], 1
    %256 = vsyncpa [#allocation6], 1
    %257 = vsyncpa [#allocation4], 1

</llo_original>
